<compile_context>
chip_gen: v5e
topology: v5e:2x2
jax: 0.10.0
libtpu: 0.0.40
codegen_flags: <defaults>
</compile_context>

<pallas_src>
import jax
import jax.numpy as jnp
import numpy as np
from jax.experimental import pallas as pl
from jax.experimental.pallas import tpu as pltpu

# ----------------------------- config ---------------------------------------
B = 2            # batch
T = 8            # sequence length
CIN = 10         # Conv1d in_channels (fixed by the module)
F1 = 32          # filter_1  (conv out channels == LSTM1 input size)
H1 = 32          # filter_lstm[0]
H2 = 16          # filter_lstm[1]
NEG_SLOPE = 0.01  # nn.LeakyReLU default

# Packed-parameter layout (single (P_ROWS, 128) f32 buffer; 8-aligned rows).
ROW_WC = 0                      # (CIN, F1)     lanes [0, F1)
ROW_BC = 16                     # (1, F1)       lanes [0, F1)
ROW_WIH1 = 24                   # (F1, 4*H1)    lanes [0, 4*H1)
ROW_WHH1 = 56                   # (H1, 4*H1)
ROW_B1 = 88                     # (1, 4*H1)
ROW_WIH2 = 96                   # (H1, 4*H2)    lanes [0, 4*H2)
ROW_WHH2 = 128                  # (H2, 4*H2)
ROW_B2 = 144                    # (1, 4*H2)
P_ROWS = 152
P_LANES = 128


def _sigmoid(x):
    # Single EUP tanh push instead of exp + add + reciprocal.
    return 0.5 * (jnp.tanh(0.5 * x) + 1.0)


# ----------------------------- kernel ---------------------------------------
def tae_encoder_kernel(
    x_ref,      # (T*B, CIN)       time-major rows: row = t*B + b
    p_ref,      # (P_ROWS, 128)    packed weights/biases (see layout above)
    out_ref,    # (T*B, H2)        row = t*B + b
):
    # ---- one-time parameter unpack (static slices, off the critical path) --
    wc = p_ref[ROW_WC:ROW_WC + CIN, 0:F1]              # (CIN, F1)
    bc = p_ref[ROW_BC:ROW_BC + 1, 0:F1]                # (1, F1)
    wih1 = p_ref[ROW_WIH1:ROW_WIH1 + F1, 0:4 * H1]     # (F1, 4*H1)
    whh1 = p_ref[ROW_WHH1:ROW_WHH1 + H1, 0:4 * H1]     # (H1, 4*H1)
    b1 = p_ref[ROW_B1:ROW_B1 + 1, 0:4 * H1]            # (1, 4*H1)
    wih2 = p_ref[ROW_WIH2:ROW_WIH2 + H1, 0:4 * H2]     # (H1, 4*H2)
    whh2 = p_ref[ROW_WHH2:ROW_WHH2 + H2, 0:4 * H2]     # (H2, 4*H2)
    b2 = p_ref[ROW_B2:ROW_B2 + 1, 0:4 * H2]            # (1, 4*H2)

    # ---- hoisted, non-recurrent work for ALL timesteps ----------------------
    x = x_ref[...]                                               # (T*B, CIN)
    z = jnp.dot(x, wc, preferred_element_type=jnp.float32) + bc
    z = jnp.where(z > 0, z, NEG_SLOPE * z)                       # LeakyReLU
    # LSTM1 input projection for all steps: (T*B, 4*H1)
    u1 = jnp.dot(z, wih1, preferred_element_type=jnp.float32) + b1

    # ---- LSTM1 recurrence: states carried in vregs, static unroll ----------
    # (PyTorch gate order: i, f, g, o.)
    h1 = None
    c1 = None
    h1_steps = []
    for t in range(T):
        u1_t = u1[t * B:(t + 1) * B, :]                          # (B, 4*H1)
        if t == 0:
            g1 = u1_t                        # h1 == 0 -> skip h@whh push
        else:
            g1 = u1_t + jnp.dot(h1, whh1, preferred_element_type=jnp.float32)
        s1 = _sigmoid(g1)                    # one full-width sigmoid
        t1 = jnp.tanh(g1)                    # one full-width tanh
        i1 = s1[:, 0 * H1:1 * H1]
        f1 = s1[:, 1 * H1:2 * H1]
        gg1 = t1[:, 2 * H1:3 * H1]
        o1 = s1[:, 3 * H1:4 * H1]
        if t == 0:
            c1 = i1 * gg1                    # c1 == 0 -> skip f*c term
        else:
            c1 = f1 * c1 + i1 * gg1
        h1 = o1 * jnp.tanh(c1)
        h1_steps.append(h1)

    # ---- batched (off-chain) act_lstm_1 + LSTM2 input projection -----------
    h1_all = jnp.concatenate(h1_steps, axis=0)                   # (T*B, H1)
    a1_all = jnp.tanh(h1_all)                                    # act_lstm_1
    u2 = jnp.dot(a1_all, wih2, preferred_element_type=jnp.float32) + b2

    # ---- LSTM2 recurrence ----------------------------------------------------
    h2 = None
    c2 = None
    h2_steps = []
    for t in range(T):
        u2_t = u2[t * B:(t + 1) * B, :]                          # (B, 4*H2)
        if t == 0:
            g2 = u2_t
        else:
            g2 = u2_t + jnp.dot(h2, whh2, preferred_element_type=jnp.float32)
        s2 = _sigmoid(g2)
        t2 = jnp.tanh(g2)
        i2 = s2[:, 0 * H2:1 * H2]
        f2 = s2[:, 1 * H2:2 * H2]
        gg2 = t2[:, 2 * H2:3 * H2]
        o2 = s2[:, 3 * H2:4 * H2]
        if t == 0:
            c2 = i2 * gg2
        else:
            c2 = f2 * c2 + i2 * gg2
        h2 = o2 * jnp.tanh(c2)
        h2_steps.append(h2)

    # ---- batched final tanh + ONE store of the whole output slab -----------
    h2_all = jnp.concatenate(h2_steps, axis=0)                   # (T*B, H2)
    out_ref[...] = jnp.tanh(h2_all)                              # act_lstm_2


# ----------------------------- host-side packing -----------------------------
def pack_params(params):
    """Pack the 8 weight/bias arrays into one (P_ROWS, 128) f32 buffer."""
    wc, bc, wih1, whh1, b1, wih2, whh2, b2 = params
    p = jnp.zeros((P_ROWS, P_LANES), jnp.float32)
    p = p.at[ROW_WC:ROW_WC + CIN, 0:F1].set(wc)
    p = p.at[ROW_BC, 0:F1].set(bc[0])
    p = p.at[ROW_WIH1:ROW_WIH1 + F1, 0:4 * H1].set(wih1)
    p = p.at[ROW_WHH1:ROW_WHH1 + H1, 0:4 * H1].set(whh1)
    p = p.at[ROW_B1, 0:4 * H1].set(b1[0])
    p = p.at[ROW_WIH2:ROW_WIH2 + H1, 0:4 * H2].set(wih2)
    p = p.at[ROW_WHH2:ROW_WHH2 + H2, 0:4 * H2].set(whh2)
    p = p.at[ROW_B2, 0:4 * H2].set(b2[0])
    return p


# ----------------------------- wrapper ---------------------------------------
def tae_encoder(x, packed_params):
    """x: (B, T, CIN) float32 -> (B, T, H2) float32."""
    # Time-major 2-D rows so all per-step inputs are contiguous row blocks.
    x2d = jnp.transpose(x, (1, 0, 2)).reshape(T * B, CIN)

    vmem = pl.BlockSpec(memory_space=pltpu.MemorySpace.VMEM)
    out2d = pl.pallas_call(
        tae_encoder_kernel,
        out_shape=jax.ShapeDtypeStruct((T * B, H2), jnp.float32),
        in_specs=[vmem, vmem],
        out_specs=vmem,
    )(x2d, packed_params)
    # (T*B, H2) rows are t-major -> (B, T, H2)
    return jnp.transpose(out2d.reshape(T, B, H2), (1, 0, 2))


# ----------------------------- pure-JAX reference ----------------------------
def ref_forward(x, params):
    wc, bc, wih1, whh1, b1, wih2, whh2, b2 = params

    z = jnp.einsum("btc,cf->btf", x, wc) + bc[0]
    z = jnp.where(z > 0, z, NEG_SLOPE * z)

    def run_lstm(seq, wih, whh, b, H):
        def step(carry, xt):
            h, c = carry
            g = xt @ wih + h @ whh + b[0]
            i = jax.nn.sigmoid(g[:, :H])
            f = jax.nn.sigmoid(g[:, H:2 * H])
            gg = jnp.tanh(g[:, 2 * H:3 * H])
            o = jax.nn.sigmoid(g[:, 3 * H:])
            c = f * c + i * gg
            h = o * jnp.tanh(c)
            return (h, c), h
        init = (jnp.zeros((seq.shape[0], H)), jnp.zeros((seq.shape[0], H)))
        _, hs = jax.lax.scan(step, init, jnp.swapaxes(seq, 0, 1))
        return jnp.swapaxes(hs, 0, 1)

    a1 = jnp.tanh(run_lstm(z, wih1, whh1, b1, H1))
    a2 = jnp.tanh(run_lstm(a1, wih2, whh2, b2, H2))
    return a2


# ----------------------------- main -------------------------------------------
if __name__ == "__main__":
    key = jax.random.PRNGKey(0)
    ks = jax.random.split(key, 11)

    def u(k, shape, fan):
        bound = 1.0 / np.sqrt(fan)
        return jax.random.uniform(k, shape, jnp.float32, -bound, bound)

    # Parameters (deterministic, PyTorch-default-style uniform init), already
    # transposed into (in, out) layout for the kernel.
    wc = u(ks[0], (CIN, F1), CIN)              # Conv1d weight (F1, CIN, 1) -> (CIN, F1)
    bc = u(ks[1], (1, F1), CIN)
    wih1 = u(ks[2], (F1, 4 * H1), H1)          # (4H1, F1) -> (F1, 4H1)
    whh1 = u(ks[3], (H1, 4 * H1), H1)
    b1 = u(ks[4], (1, 4 * H1), H1) + u(ks[5], (1, 4 * H1), H1)   # b_ih + b_hh
    wih2 = u(ks[6], (H1, 4 * H2), H2)
    whh2 = u(ks[7], (H2, 4 * H2), H2)
    b2 = u(ks[8], (1, 4 * H2), H2) + u(ks[9], (1, 4 * H2), H2)   # b_ih + b_hh

    params = (wc, bc, wih1, whh1, b1, wih2, whh2, b2)
    packed = jax.block_until_ready(pack_params(params))

    x = jax.random.normal(ks[10], (B, T, CIN), jnp.float32)

    out = jax.block_until_ready(tae_encoder(x, packed))
    ref = jax.block_until_ready(ref_forward(x, params))
    np.testing.assert_allclose(np.asarray(out), np.asarray(ref),
                               atol=1e-4, rtol=1e-4)

    print("KERNEL_OK")
</pallas_src>

<mosaic_0001>
module attributes {stable_mosaic.version = 11 : i64} {
  func.func @tae_encoder_kernel(%arg0: memref<16x10xf32, #tpu.memory_space<vmem>>, %arg1: memref<152x128xf32, #tpu.memory_space<vmem>>, %arg2: memref<16x16xf32, #tpu.memory_space<vmem>>) attributes {dimension_semantics = [], scalar_prefetch = 0 : i64, scratch_operands = 0 : i64, tpu.core_type = #tpu.core_type<tc>} {
    %c0 = arith.constant 0 : index
    %c0_0 = arith.constant 0 : index
    %0 = vector.load %arg1[%c0, %c0_0] : memref<152x128xf32, #tpu.memory_space<vmem>>, vector<10x32xf32>
    %c16 = arith.constant 16 : index
    %c0_1 = arith.constant 0 : index
    %1 = vector.load %arg1[%c16, %c0_1] : memref<152x128xf32, #tpu.memory_space<vmem>>, vector<1x32xf32>
    %c24 = arith.constant 24 : index
    %c0_2 = arith.constant 0 : index
    %2 = vector.load %arg1[%c24, %c0_2] : memref<152x128xf32, #tpu.memory_space<vmem>>, vector<32x128xf32>
    %c56 = arith.constant 56 : index
    %c0_3 = arith.constant 0 : index
    %3 = vector.load %arg1[%c56, %c0_3] : memref<152x128xf32, #tpu.memory_space<vmem>>, vector<32x128xf32>
    %c88 = arith.constant 88 : index
    %c0_4 = arith.constant 0 : index
    %4 = vector.load %arg1[%c88, %c0_4] : memref<152x128xf32, #tpu.memory_space<vmem>>, vector<1x128xf32>
    %c96 = arith.constant 96 : index
    %c0_5 = arith.constant 0 : index
    %5 = vector.load %arg1[%c96, %c0_5] : memref<152x128xf32, #tpu.memory_space<vmem>>, vector<32x64xf32>
    %c128 = arith.constant 128 : index
    %c0_6 = arith.constant 0 : index
    %6 = vector.load %arg1[%c128, %c0_6] : memref<152x128xf32, #tpu.memory_space<vmem>>, vector<16x64xf32>
    %c144 = arith.constant 144 : index
    %c0_7 = arith.constant 0 : index
    %7 = vector.load %arg1[%c144, %c0_7] : memref<152x128xf32, #tpu.memory_space<vmem>>, vector<1x64xf32>
    %c0_8 = arith.constant 0 : index
    %c0_9 = arith.constant 0 : index
    %8 = vector.load %arg0[%c0_8, %c0_9] : memref<16x10xf32, #tpu.memory_space<vmem>>, vector<16x10xf32>
    %cst = arith.constant dense<0.000000e+00> : vector<16x32xf32>
    %9 = tpu.matmul %8, %0, %cst {dimension_numbers = #tpu.dot_dimension_numbers<[1], [0], [0], [1], [0, 0, 1, 1], [], []>} : vector<16x10xf32>, vector<10x32xf32>, vector<16x32xf32> -> vector<16x32xf32>
    %10 = vector.broadcast %1 : vector<1x32xf32> to vector<16x32xf32>
    %11 = arith.addf %9, %10 : vector<16x32xf32>
    %cst_10 = arith.constant 0.000000e+00 : f32
    %12 = vector.broadcast %cst_10 : f32 to vector<16x32xf32>
    %13 = arith.cmpf ogt, %11, %12 : vector<16x32xf32>
    %cst_11 = arith.constant 0.00999999977 : f32
    %14 = vector.broadcast %cst_11 : f32 to vector<16x32xf32>
    %15 = arith.mulf %14, %11 : vector<16x32xf32>
    %16 = arith.select %13, %11, %15 : vector<16x32xi1>, vector<16x32xf32>
    %cst_12 = arith.constant dense<0.000000e+00> : vector<16x128xf32>
    %17 = tpu.matmul %16, %2, %cst_12 {dimension_numbers = #tpu.dot_dimension_numbers<[1], [0], [0], [1], [0, 0, 1, 1], [], []>} : vector<16x32xf32>, vector<32x128xf32>, vector<16x128xf32> -> vector<16x128xf32>
    %18 = vector.broadcast %4 : vector<1x128xf32> to vector<16x128xf32>
    %19 = arith.addf %17, %18 : vector<16x128xf32>
    %20 = vector.extract_strided_slice %19 {offsets = [0, 0], sizes = [2, 128], strides = [1, 1]} : vector<16x128xf32> to vector<2x128xf32>
    %cst_13 = arith.constant 5.000000e-01 : f32
    %21 = vector.broadcast %cst_13 : f32 to vector<2x128xf32>
    %22 = arith.mulf %21, %20 : vector<2x128xf32>
    %23 = math.tanh %22 : vector<2x128xf32>
    %cst_14 = arith.constant 1.000000e+00 : f32
    %24 = vector.broadcast %cst_14 : f32 to vector<2x128xf32>
    %25 = arith.addf %23, %24 : vector<2x128xf32>
    %cst_15 = arith.constant 5.000000e-01 : f32
    %26 = vector.broadcast %cst_15 : f32 to vector<2x128xf32>
    %27 = arith.mulf %26, %25 : vector<2x128xf32>
    %28 = math.tanh %20 : vector<2x128xf32>
    %29 = vector.extract_strided_slice %27 {offsets = [0, 0], sizes = [2, 32], strides = [1, 1]} : vector<2x128xf32> to vector<2x32xf32>
    %30 = vector.extract_strided_slice %28 {offsets = [0, 64], sizes = [2, 32], strides = [1, 1]} : vector<2x128xf32> to vector<2x32xf32>
    %31 = vector.extract_strided_slice %27 {offsets = [0, 96], sizes = [2, 32], strides = [1, 1]} : vector<2x128xf32> to vector<2x32xf32>
    %32 = arith.mulf %29, %30 : vector<2x32xf32>
    %33 = math.tanh %32 : vector<2x32xf32>
    %34 = arith.mulf %31, %33 : vector<2x32xf32>
    %35 = vector.extract_strided_slice %19 {offsets = [2, 0], sizes = [2, 128], strides = [1, 1]} : vector<16x128xf32> to vector<2x128xf32>
    %cst_16 = arith.constant dense<0.000000e+00> : vector<2x128xf32>
    %36 = tpu.matmul %34, %3, %cst_16 {dimension_numbers = #tpu.dot_dimension_numbers<[1], [0], [0], [1], [0, 0, 1, 1], [], []>} : vector<2x32xf32>, vector<32x128xf32>, vector<2x128xf32> -> vector<2x128xf32>
    %37 = arith.addf %35, %36 : vector<2x128xf32>
    %cst_17 = arith.constant 5.000000e-01 : f32
    %38 = vector.broadcast %cst_17 : f32 to vector<2x128xf32>
    %39 = arith.mulf %38, %37 : vector<2x128xf32>
    %40 = math.tanh %39 : vector<2x128xf32>
    %cst_18 = arith.constant 1.000000e+00 : f32
    %41 = vector.broadcast %cst_18 : f32 to vector<2x128xf32>
    %42 = arith.addf %40, %41 : vector<2x128xf32>
    %cst_19 = arith.constant 5.000000e-01 : f32
    %43 = vector.broadcast %cst_19 : f32 to vector<2x128xf32>
    %44 = arith.mulf %43, %42 : vector<2x128xf32>
    %45 = math.tanh %37 : vector<2x128xf32>
    %46 = vector.extract_strided_slice %44 {offsets = [0, 0], sizes = [2, 32], strides = [1, 1]} : vector<2x128xf32> to vector<2x32xf32>
    %47 = vector.extract_strided_slice %44 {offsets = [0, 32], sizes = [2, 32], strides = [1, 1]} : vector<2x128xf32> to vector<2x32xf32>
    %48 = vector.extract_strided_slice %45 {offsets = [0, 64], sizes = [2, 32], strides = [1, 1]} : vector<2x128xf32> to vector<2x32xf32>
    %49 = vector.extract_strided_slice %44 {offsets = [0, 96], sizes = [2, 32], strides = [1, 1]} : vector<2x128xf32> to vector<2x32xf32>
    %50 = arith.mulf %47, %32 : vector<2x32xf32>
    %51 = arith.mulf %46, %48 : vector<2x32xf32>
    %52 = arith.addf %50, %51 : vector<2x32xf32>
    %53 = math.tanh %52 : vector<2x32xf32>
    %54 = arith.mulf %49, %53 : vector<2x32xf32>
    %55 = vector.extract_strided_slice %19 {offsets = [4, 0], sizes = [2, 128], strides = [1, 1]} : vector<16x128xf32> to vector<2x128xf32>
    %cst_20 = arith.constant dense<0.000000e+00> : vector<2x128xf32>
    %56 = tpu.matmul %54, %3, %cst_20 {dimension_numbers = #tpu.dot_dimension_numbers<[1], [0], [0], [1], [0, 0, 1, 1], [], []>} : vector<2x32xf32>, vector<32x128xf32>, vector<2x128xf32> -> vector<2x128xf32>
    %57 = arith.addf %55, %56 : vector<2x128xf32>
    %cst_21 = arith.constant 5.000000e-01 : f32
    %58 = vector.broadcast %cst_21 : f32 to vector<2x128xf32>
    %59 = arith.mulf %58, %57 : vector<2x128xf32>
    %60 = math.tanh %59 : vector<2x128xf32>
    %cst_22 = arith.constant 1.000000e+00 : f32
    %61 = vector.broadcast %cst_22 : f32 to vector<2x128xf32>
    %62 = arith.addf %60, %61 : vector<2x128xf32>
    %cst_23 = arith.constant 5.000000e-01 : f32
    %63 = vector.broadcast %cst_23 : f32 to vector<2x128xf32>
    %64 = arith.mulf %63, %62 : vector<2x128xf32>
    %65 = math.tanh %57 : vector<2x128xf32>
    %66 = vector.extract_strided_slice %64 {offsets = [0, 0], sizes = [2, 32], strides = [1, 1]} : vector<2x128xf32> to vector<2x32xf32>
    %67 = vector.extract_strided_slice %64 {offsets = [0, 32], sizes = [2, 32], strides = [1, 1]} : vector<2x128xf32> to vector<2x32xf32>
    %68 = vector.extract_strided_slice %65 {offsets = [0, 64], sizes = [2, 32], strides = [1, 1]} : vector<2x128xf32> to vector<2x32xf32>
    %69 = vector.extract_strided_slice %64 {offsets = [0, 96], sizes = [2, 32], strides = [1, 1]} : vector<2x128xf32> to vector<2x32xf32>
    %70 = arith.mulf %67, %52 : vector<2x32xf32>
    %71 = arith.mulf %66, %68 : vector<2x32xf32>
    %72 = arith.addf %70, %71 : vector<2x32xf32>
    %73 = math.tanh %72 : vector<2x32xf32>
    %74 = arith.mulf %69, %73 : vector<2x32xf32>
    %75 = vector.extract_strided_slice %19 {offsets = [6, 0], sizes = [2, 128], strides = [1, 1]} : vector<16x128xf32> to vector<2x128xf32>
    %cst_24 = arith.constant dense<0.000000e+00> : vector<2x128xf32>
    %76 = tpu.matmul %74, %3, %cst_24 {dimension_numbers = #tpu.dot_dimension_numbers<[1], [0], [0], [1], [0, 0, 1, 1], [], []>} : vector<2x32xf32>, vector<32x128xf32>, vector<2x128xf32> -> vector<2x128xf32>
    %77 = arith.addf %75, %76 : vector<2x128xf32>
    %cst_25 = arith.constant 5.000000e-01 : f32
    %78 = vector.broadcast %cst_25 : f32 to vector<2x128xf32>
    %79 = arith.mulf %78, %77 : vector<2x128xf32>
    %80 = math.tanh %79 : vector<2x128xf32>
    %cst_26 = arith.constant 1.000000e+00 : f32
    %81 = vector.broadcast %cst_26 : f32 to vector<2x128xf32>
    %82 = arith.addf %80, %81 : vector<2x128xf32>
    %cst_27 = arith.constant 5.000000e-01 : f32
    %83 = vector.broadcast %cst_27 : f32 to vector<2x128xf32>
    %84 = arith.mulf %83, %82 : vector<2x128xf32>
    %85 = math.tanh %77 : vector<2x128xf32>
    %86 = vector.extract_strided_slice %84 {offsets = [0, 0], sizes = [2, 32], strides = [1, 1]} : vector<2x128xf32> to vector<2x32xf32>
    %87 = vector.extract_strided_slice %84 {offsets = [0, 32], sizes = [2, 32], strides = [1, 1]} : vector<2x128xf32> to vector<2x32xf32>
    %88 = vector.extract_strided_slice %85 {offsets = [0, 64], sizes = [2, 32], strides = [1, 1]} : vector<2x128xf32> to vector<2x32xf32>
    %89 = vector.extract_strided_slice %84 {offsets = [0, 96], sizes = [2, 32], strides = [1, 1]} : vector<2x128xf32> to vector<2x32xf32>
    %90 = arith.mulf %87, %72 : vector<2x32xf32>
    %91 = arith.mulf %86, %88 : vector<2x32xf32>
    %92 = arith.addf %90, %91 : vector<2x32xf32>
    %93 = math.tanh %92 : vector<2x32xf32>
    %94 = arith.mulf %89, %93 : vector<2x32xf32>
    %95 = vector.extract_strided_slice %19 {offsets = [8, 0], sizes = [2, 128], strides = [1, 1]} : vector<16x128xf32> to vector<2x128xf32>
    %cst_28 = arith.constant dense<0.000000e+00> : vector<2x128xf32>
    %96 = tpu.matmul %94, %3, %cst_28 {dimension_numbers = #tpu.dot_dimension_numbers<[1], [0], [0], [1], [0, 0, 1, 1], [], []>} : vector<2x32xf32>, vector<32x128xf32>, vector<2x128xf32> -> vector<2x128xf32>
    %97 = arith.addf %95, %96 : vector<2x128xf32>
    %cst_29 = arith.constant 5.000000e-01 : f32
    %98 = vector.broadcast %cst_29 : f32 to vector<2x128xf32>
    %99 = arith.mulf %98, %97 : vector<2x128xf32>
    %100 = math.tanh %99 : vector<2x128xf32>
    %cst_30 = arith.constant 1.000000e+00 : f32
    %101 = vector.broadcast %cst_30 : f32 to vector<2x128xf32>
    %102 = arith.addf %100, %101 : vector<2x128xf32>
    %cst_31 = arith.constant 5.000000e-01 : f32
    %103 = vector.broadcast %cst_31 : f32 to vector<2x128xf32>
    %104 = arith.mulf %103, %102 : vector<2x128xf32>
    %105 = math.tanh %97 : vector<2x128xf32>
    %106 = vector.extract_strided_slice %104 {offsets = [0, 0], sizes = [2, 32], strides = [1, 1]} : vector<2x128xf32> to vector<2x32xf32>
    %107 = vector.extract_strided_slice %104 {offsets = [0, 32], sizes = [2, 32], strides = [1, 1]} : vector<2x128xf32> to vector<2x32xf32>
    %108 = vector.extract_strided_slice %105 {offsets = [0, 64], sizes = [2, 32], strides = [1, 1]} : vector<2x128xf32> to vector<2x32xf32>
    %109 = vector.extract_strided_slice %104 {offsets = [0, 96], sizes = [2, 32], strides = [1, 1]} : vector<2x128xf32> to vector<2x32xf32>
    %110 = arith.mulf %107, %92 : vector<2x32xf32>
    %111 = arith.mulf %106, %108 : vector<2x32xf32>
    %112 = arith.addf %110, %111 : vector<2x32xf32>
    %113 = math.tanh %112 : vector<2x32xf32>
    %114 = arith.mulf %109, %113 : vector<2x32xf32>
    %115 = vector.extract_strided_slice %19 {offsets = [10, 0], sizes = [2, 128], strides = [1, 1]} : vector<16x128xf32> to vector<2x128xf32>
    %cst_32 = arith.constant dense<0.000000e+00> : vector<2x128xf32>
    %116 = tpu.matmul %114, %3, %cst_32 {dimension_numbers = #tpu.dot_dimension_numbers<[1], [0], [0], [1], [0, 0, 1, 1], [], []>} : vector<2x32xf32>, vector<32x128xf32>, vector<2x128xf32> -> vector<2x128xf32>
    %117 = arith.addf %115, %116 : vector<2x128xf32>
    %cst_33 = arith.constant 5.000000e-01 : f32
    %118 = vector.broadcast %cst_33 : f32 to vector<2x128xf32>
    %119 = arith.mulf %118, %117 : vector<2x128xf32>
    %120 = math.tanh %119 : vector<2x128xf32>
    %cst_34 = arith.constant 1.000000e+00 : f32
    %121 = vector.broadcast %cst_34 : f32 to vector<2x128xf32>
    %122 = arith.addf %120, %121 : vector<2x128xf32>
    %cst_35 = arith.constant 5.000000e-01 : f32
    %123 = vector.broadcast %cst_35 : f32 to vector<2x128xf32>
    %124 = arith.mulf %123, %122 : vector<2x128xf32>
    %125 = math.tanh %117 : vector<2x128xf32>
    %126 = vector.extract_strided_slice %124 {offsets = [0, 0], sizes = [2, 32], strides = [1, 1]} : vector<2x128xf32> to vector<2x32xf32>
    %127 = vector.extract_strided_slice %124 {offsets = [0, 32], sizes = [2, 32], strides = [1, 1]} : vector<2x128xf32> to vector<2x32xf32>
    %128 = vector.extract_strided_slice %125 {offsets = [0, 64], sizes = [2, 32], strides = [1, 1]} : vector<2x128xf32> to vector<2x32xf32>
    %129 = vector.extract_strided_slice %124 {offsets = [0, 96], sizes = [2, 32], strides = [1, 1]} : vector<2x128xf32> to vector<2x32xf32>
    %130 = arith.mulf %127, %112 : vector<2x32xf32>
    %131 = arith.mulf %126, %128 : vector<2x32xf32>
    %132 = arith.addf %130, %131 : vector<2x32xf32>
    %133 = math.tanh %132 : vector<2x32xf32>
    %134 = arith.mulf %129, %133 : vector<2x32xf32>
    %135 = vector.extract_strided_slice %19 {offsets = [12, 0], sizes = [2, 128], strides = [1, 1]} : vector<16x128xf32> to vector<2x128xf32>
    %cst_36 = arith.constant dense<0.000000e+00> : vector<2x128xf32>
    %136 = tpu.matmul %134, %3, %cst_36 {dimension_numbers = #tpu.dot_dimension_numbers<[1], [0], [0], [1], [0, 0, 1, 1], [], []>} : vector<2x32xf32>, vector<32x128xf32>, vector<2x128xf32> -> vector<2x128xf32>
    %137 = arith.addf %135, %136 : vector<2x128xf32>
    %cst_37 = arith.constant 5.000000e-01 : f32
    %138 = vector.broadcast %cst_37 : f32 to vector<2x128xf32>
    %139 = arith.mulf %138, %137 : vector<2x128xf32>
    %140 = math.tanh %139 : vector<2x128xf32>
    %cst_38 = arith.constant 1.000000e+00 : f32
    %141 = vector.broadcast %cst_38 : f32 to vector<2x128xf32>
    %142 = arith.addf %140, %141 : vector<2x128xf32>
    %cst_39 = arith.constant 5.000000e-01 : f32
    %143 = vector.broadcast %cst_39 : f32 to vector<2x128xf32>
    %144 = arith.mulf %143, %142 : vector<2x128xf32>
    %145 = math.tanh %137 : vector<2x128xf32>
    %146 = vector.extract_strided_slice %144 {offsets = [0, 0], sizes = [2, 32], strides = [1, 1]} : vector<2x128xf32> to vector<2x32xf32>
    %147 = vector.extract_strided_slice %144 {offsets = [0, 32], sizes = [2, 32], strides = [1, 1]} : vector<2x128xf32> to vector<2x32xf32>
    %148 = vector.extract_strided_slice %145 {offsets = [0, 64], sizes = [2, 32], strides = [1, 1]} : vector<2x128xf32> to vector<2x32xf32>
    %149 = vector.extract_strided_slice %144 {offsets = [0, 96], sizes = [2, 32], strides = [1, 1]} : vector<2x128xf32> to vector<2x32xf32>
    %150 = arith.mulf %147, %132 : vector<2x32xf32>
    %151 = arith.mulf %146, %148 : vector<2x32xf32>
    %152 = arith.addf %150, %151 : vector<2x32xf32>
    %153 = math.tanh %152 : vector<2x32xf32>
    %154 = arith.mulf %149, %153 : vector<2x32xf32>
    %155 = vector.extract_strided_slice %19 {offsets = [14, 0], sizes = [2, 128], strides = [1, 1]} : vector<16x128xf32> to vector<2x128xf32>
    %cst_40 = arith.constant dense<0.000000e+00> : vector<2x128xf32>
    %156 = tpu.matmul %154, %3, %cst_40 {dimension_numbers = #tpu.dot_dimension_numbers<[1], [0], [0], [1], [0, 0, 1, 1], [], []>} : vector<2x32xf32>, vector<32x128xf32>, vector<2x128xf32> -> vector<2x128xf32>
    %157 = arith.addf %155, %156 : vector<2x128xf32>
    %cst_41 = arith.constant 5.000000e-01 : f32
    %158 = vector.broadcast %cst_41 : f32 to vector<2x128xf32>
    %159 = arith.mulf %158, %157 : vector<2x128xf32>
    %160 = math.tanh %159 : vector<2x128xf32>
    %cst_42 = arith.constant 1.000000e+00 : f32
    %161 = vector.broadcast %cst_42 : f32 to vector<2x128xf32>
    %162 = arith.addf %160, %161 : vector<2x128xf32>
    %cst_43 = arith.constant 5.000000e-01 : f32
    %163 = vector.broadcast %cst_43 : f32 to vector<2x128xf32>
    %164 = arith.mulf %163, %162 : vector<2x128xf32>
    %165 = math.tanh %157 : vector<2x128xf32>
    %166 = vector.extract_strided_slice %164 {offsets = [0, 0], sizes = [2, 32], strides = [1, 1]} : vector<2x128xf32> to vector<2x32xf32>
    %167 = vector.extract_strided_slice %164 {offsets = [0, 32], sizes = [2, 32], strides = [1, 1]} : vector<2x128xf32> to vector<2x32xf32>
    %168 = vector.extract_strided_slice %165 {offsets = [0, 64], sizes = [2, 32], strides = [1, 1]} : vector<2x128xf32> to vector<2x32xf32>
    %169 = vector.extract_strided_slice %164 {offsets = [0, 96], sizes = [2, 32], strides = [1, 1]} : vector<2x128xf32> to vector<2x32xf32>
    %170 = arith.mulf %167, %152 : vector<2x32xf32>
    %171 = arith.mulf %166, %168 : vector<2x32xf32>
    %172 = arith.addf %170, %171 : vector<2x32xf32>
    %173 = math.tanh %172 : vector<2x32xf32>
    %174 = arith.mulf %169, %173 : vector<2x32xf32>
    %175 = tpu.concatenate %34, %54, %74, %94, %114, %134, %154, %174 in 0 : vector<2x32xf32>, vector<2x32xf32>, vector<2x32xf32>, vector<2x32xf32>, vector<2x32xf32>, vector<2x32xf32>, vector<2x32xf32>, vector<2x32xf32> -> vector<16x32xf32>
    %176 = math.tanh %175 : vector<16x32xf32>
    %cst_44 = arith.constant dense<0.000000e+00> : vector<16x64xf32>
    %177 = tpu.matmul %176, %5, %cst_44 {dimension_numbers = #tpu.dot_dimension_numbers<[1], [0], [0], [1], [0, 0, 1, 1], [], []>} : vector<16x32xf32>, vector<32x64xf32>, vector<16x64xf32> -> vector<16x64xf32>
    %178 = vector.broadcast %7 : vector<1x64xf32> to vector<16x64xf32>
    %179 = arith.addf %177, %178 : vector<16x64xf32>
    %180 = vector.extract_strided_slice %179 {offsets = [0, 0], sizes = [2, 64], strides = [1, 1]} : vector<16x64xf32> to vector<2x64xf32>
    %cst_45 = arith.constant 5.000000e-01 : f32
    %181 = vector.broadcast %cst_45 : f32 to vector<2x64xf32>
    %182 = arith.mulf %181, %180 : vector<2x64xf32>
    %183 = math.tanh %182 : vector<2x64xf32>
    %cst_46 = arith.constant 1.000000e+00 : f32
    %184 = vector.broadcast %cst_46 : f32 to vector<2x64xf32>
    %185 = arith.addf %183, %184 : vector<2x64xf32>
    %cst_47 = arith.constant 5.000000e-01 : f32
    %186 = vector.broadcast %cst_47 : f32 to vector<2x64xf32>
    %187 = arith.mulf %186, %185 : vector<2x64xf32>
    %188 = math.tanh %180 : vector<2x64xf32>
    %189 = vector.extract_strided_slice %187 {offsets = [0, 0], sizes = [2, 16], strides = [1, 1]} : vector<2x64xf32> to vector<2x16xf32>
    %190 = vector.extract_strided_slice %188 {offsets = [0, 32], sizes = [2, 16], strides = [1, 1]} : vector<2x64xf32> to vector<2x16xf32>
    %191 = vector.extract_strided_slice %187 {offsets = [0, 48], sizes = [2, 16], strides = [1, 1]} : vector<2x64xf32> to vector<2x16xf32>
    %192 = arith.mulf %189, %190 : vector<2x16xf32>
    %193 = math.tanh %192 : vector<2x16xf32>
    %194 = arith.mulf %191, %193 : vector<2x16xf32>
    %195 = vector.extract_strided_slice %179 {offsets = [2, 0], sizes = [2, 64], strides = [1, 1]} : vector<16x64xf32> to vector<2x64xf32>
    %cst_48 = arith.constant dense<0.000000e+00> : vector<2x64xf32>
    %196 = tpu.matmul %194, %6, %cst_48 {dimension_numbers = #tpu.dot_dimension_numbers<[1], [0], [0], [1], [0, 0, 1, 1], [], []>} : vector<2x16xf32>, vector<16x64xf32>, vector<2x64xf32> -> vector<2x64xf32>
    %197 = arith.addf %195, %196 : vector<2x64xf32>
    %cst_49 = arith.constant 5.000000e-01 : f32
    %198 = vector.broadcast %cst_49 : f32 to vector<2x64xf32>
    %199 = arith.mulf %198, %197 : vector<2x64xf32>
    %200 = math.tanh %199 : vector<2x64xf32>
    %cst_50 = arith.constant 1.000000e+00 : f32
    %201 = vector.broadcast %cst_50 : f32 to vector<2x64xf32>
    %202 = arith.addf %200, %201 : vector<2x64xf32>
    %cst_51 = arith.constant 5.000000e-01 : f32
    %203 = vector.broadcast %cst_51 : f32 to vector<2x64xf32>
    %204 = arith.mulf %203, %202 : vector<2x64xf32>
    %205 = math.tanh %197 : vector<2x64xf32>
    %206 = vector.extract_strided_slice %204 {offsets = [0, 0], sizes = [2, 16], strides = [1, 1]} : vector<2x64xf32> to vector<2x16xf32>
    %207 = vector.extract_strided_slice %204 {offsets = [0, 16], sizes = [2, 16], strides = [1, 1]} : vector<2x64xf32> to vector<2x16xf32>
    %208 = vector.extract_strided_slice %205 {offsets = [0, 32], sizes = [2, 16], strides = [1, 1]} : vector<2x64xf32> to vector<2x16xf32>
    %209 = vector.extract_strided_slice %204 {offsets = [0, 48], sizes = [2, 16], strides = [1, 1]} : vector<2x64xf32> to vector<2x16xf32>
    %210 = arith.mulf %207, %192 : vector<2x16xf32>
    %211 = arith.mulf %206, %208 : vector<2x16xf32>
    %212 = arith.addf %210, %211 : vector<2x16xf32>
    %213 = math.tanh %212 : vector<2x16xf32>
    %214 = arith.mulf %209, %213 : vector<2x16xf32>
    %215 = vector.extract_strided_slice %179 {offsets = [4, 0], sizes = [2, 64], strides = [1, 1]} : vector<16x64xf32> to vector<2x64xf32>
    %cst_52 = arith.constant dense<0.000000e+00> : vector<2x64xf32>
    %216 = tpu.matmul %214, %6, %cst_52 {dimension_numbers = #tpu.dot_dimension_numbers<[1], [0], [0], [1], [0, 0, 1, 1], [], []>} : vector<2x16xf32>, vector<16x64xf32>, vector<2x64xf32> -> vector<2x64xf32>
    %217 = arith.addf %215, %216 : vector<2x64xf32>
    %cst_53 = arith.constant 5.000000e-01 : f32
    %218 = vector.broadcast %cst_53 : f32 to vector<2x64xf32>
    %219 = arith.mulf %218, %217 : vector<2x64xf32>
    %220 = math.tanh %219 : vector<2x64xf32>
    %cst_54 = arith.constant 1.000000e+00 : f32
    %221 = vector.broadcast %cst_54 : f32 to vector<2x64xf32>
    %222 = arith.addf %220, %221 : vector<2x64xf32>
    %cst_55 = arith.constant 5.000000e-01 : f32
    %223 = vector.broadcast %cst_55 : f32 to vector<2x64xf32>
    %224 = arith.mulf %223, %222 : vector<2x64xf32>
    %225 = math.tanh %217 : vector<2x64xf32>
    %226 = vector.extract_strided_slice %224 {offsets = [0, 0], sizes = [2, 16], strides = [1, 1]} : vector<2x64xf32> to vector<2x16xf32>
    %227 = vector.extract_strided_slice %224 {offsets = [0, 16], sizes = [2, 16], strides = [1, 1]} : vector<2x64xf32> to vector<2x16xf32>
    %228 = vector.extract_strided_slice %225 {offsets = [0, 32], sizes = [2, 16], strides = [1, 1]} : vector<2x64xf32> to vector<2x16xf32>
    %229 = vector.extract_strided_slice %224 {offsets = [0, 48], sizes = [2, 16], strides = [1, 1]} : vector<2x64xf32> to vector<2x16xf32>
    %230 = arith.mulf %227, %212 : vector<2x16xf32>
    %231 = arith.mulf %226, %228 : vector<2x16xf32>
    %232 = arith.addf %230, %231 : vector<2x16xf32>
    %233 = math.tanh %232 : vector<2x16xf32>
    %234 = arith.mulf %229, %233 : vector<2x16xf32>
    %235 = vector.extract_strided_slice %179 {offsets = [6, 0], sizes = [2, 64], strides = [1, 1]} : vector<16x64xf32> to vector<2x64xf32>
    %cst_56 = arith.constant dense<0.000000e+00> : vector<2x64xf32>
    %236 = tpu.matmul %234, %6, %cst_56 {dimension_numbers = #tpu.dot_dimension_numbers<[1], [0], [0], [1], [0, 0, 1, 1], [], []>} : vector<2x16xf32>, vector<16x64xf32>, vector<2x64xf32> -> vector<2x64xf32>
    %237 = arith.addf %235, %236 : vector<2x64xf32>
    %cst_57 = arith.constant 5.000000e-01 : f32
    %238 = vector.broadcast %cst_57 : f32 to vector<2x64xf32>
    %239 = arith.mulf %238, %237 : vector<2x64xf32>
    %240 = math.tanh %239 : vector<2x64xf32>
    %cst_58 = arith.constant 1.000000e+00 : f32
    %241 = vector.broadcast %cst_58 : f32 to vector<2x64xf32>
    %242 = arith.addf %240, %241 : vector<2x64xf32>
    %cst_59 = arith.constant 5.000000e-01 : f32
    %243 = vector.broadcast %cst_59 : f32 to vector<2x64xf32>
    %244 = arith.mulf %243, %242 : vector<2x64xf32>
    %245 = math.tanh %237 : vector<2x64xf32>
    %246 = vector.extract_strided_slice %244 {offsets = [0, 0], sizes = [2, 16], strides = [1, 1]} : vector<2x64xf32> to vector<2x16xf32>
    %247 = vector.extract_strided_slice %244 {offsets = [0, 16], sizes = [2, 16], strides = [1, 1]} : vector<2x64xf32> to vector<2x16xf32>
    %248 = vector.extract_strided_slice %245 {offsets = [0, 32], sizes = [2, 16], strides = [1, 1]} : vector<2x64xf32> to vector<2x16xf32>
    %249 = vector.extract_strided_slice %244 {offsets = [0, 48], sizes = [2, 16], strides = [1, 1]} : vector<2x64xf32> to vector<2x16xf32>
    %250 = arith.mulf %247, %232 : vector<2x16xf32>
    %251 = arith.mulf %246, %248 : vector<2x16xf32>
    %252 = arith.addf %250, %251 : vector<2x16xf32>
    %253 = math.tanh %252 : vector<2x16xf32>
    %254 = arith.mulf %249, %253 : vector<2x16xf32>
    %255 = vector.extract_strided_slice %179 {offsets = [8, 0], sizes = [2, 64], strides = [1, 1]} : vector<16x64xf32> to vector<2x64xf32>
    %cst_60 = arith.constant dense<0.000000e+00> : vector<2x64xf32>
    %256 = tpu.matmul %254, %6, %cst_60 {dimension_numbers = #tpu.dot_dimension_numbers<[1], [0], [0], [1], [0, 0, 1, 1], [], []>} : vector<2x16xf32>, vector<16x64xf32>, vector<2x64xf32> -> vector<2x64xf32>
    %257 = arith.addf %255, %256 : vector<2x64xf32>
    %cst_61 = arith.constant 5.000000e-01 : f32
    %258 = vector.broadcast %cst_61 : f32 to vector<2x64xf32>
    %259 = arith.mulf %258, %257 : vector<2x64xf32>
    %260 = math.tanh %259 : vector<2x64xf32>
    %cst_62 = arith.constant 1.000000e+00 : f32
    %261 = vector.broadcast %cst_62 : f32 to vector<2x64xf32>
    %262 = arith.addf %260, %261 : vector<2x64xf32>
    %cst_63 = arith.constant 5.000000e-01 : f32
    %263 = vector.broadcast %cst_63 : f32 to vector<2x64xf32>
    %264 = arith.mulf %263, %262 : vector<2x64xf32>
    %265 = math.tanh %257 : vector<2x64xf32>
    %266 = vector.extract_strided_slice %264 {offsets = [0, 0], sizes = [2, 16], strides = [1, 1]} : vector<2x64xf32> to vector<2x16xf32>
    %267 = vector.extract_strided_slice %264 {offsets = [0, 16], sizes = [2, 16], strides = [1, 1]} : vector<2x64xf32> to vector<2x16xf32>
    %268 = vector.extract_strided_slice %265 {offsets = [0, 32], sizes = [2, 16], strides = [1, 1]} : vector<2x64xf32> to vector<2x16xf32>
    %269 = vector.extract_strided_slice %264 {offsets = [0, 48], sizes = [2, 16], strides = [1, 1]} : vector<2x64xf32> to vector<2x16xf32>
    %270 = arith.mulf %267, %252 : vector<2x16xf32>
    %271 = arith.mulf %266, %268 : vector<2x16xf32>
    %272 = arith.addf %270, %271 : vector<2x16xf32>
    %273 = math.tanh %272 : vector<2x16xf32>
    %274 = arith.mulf %269, %273 : vector<2x16xf32>
    %275 = vector.extract_strided_slice %179 {offsets = [10, 0], sizes = [2, 64], strides = [1, 1]} : vector<16x64xf32> to vector<2x64xf32>
    %cst_64 = arith.constant dense<0.000000e+00> : vector<2x64xf32>
    %276 = tpu.matmul %274, %6, %cst_64 {dimension_numbers = #tpu.dot_dimension_numbers<[1], [0], [0], [1], [0, 0, 1, 1], [], []>} : vector<2x16xf32>, vector<16x64xf32>, vector<2x64xf32> -> vector<2x64xf32>
    %277 = arith.addf %275, %276 : vector<2x64xf32>
    %cst_65 = arith.constant 5.000000e-01 : f32
    %278 = vector.broadcast %cst_65 : f32 to vector<2x64xf32>
    %279 = arith.mulf %278, %277 : vector<2x64xf32>
    %280 = math.tanh %279 : vector<2x64xf32>
    %cst_66 = arith.constant 1.000000e+00 : f32
    %281 = vector.broadcast %cst_66 : f32 to vector<2x64xf32>
    %282 = arith.addf %280, %281 : vector<2x64xf32>
    %cst_67 = arith.constant 5.000000e-01 : f32
    %283 = vector.broadcast %cst_67 : f32 to vector<2x64xf32>
    %284 = arith.mulf %283, %282 : vector<2x64xf32>
    %285 = math.tanh %277 : vector<2x64xf32>
    %286 = vector.extract_strided_slice %284 {offsets = [0, 0], sizes = [2, 16], strides = [1, 1]} : vector<2x64xf32> to vector<2x16xf32>
    %287 = vector.extract_strided_slice %284 {offsets = [0, 16], sizes = [2, 16], strides = [1, 1]} : vector<2x64xf32> to vector<2x16xf32>
    %288 = vector.extract_strided_slice %285 {offsets = [0, 32], sizes = [2, 16], strides = [1, 1]} : vector<2x64xf32> to vector<2x16xf32>
    %289 = vector.extract_strided_slice %284 {offsets = [0, 48], sizes = [2, 16], strides = [1, 1]} : vector<2x64xf32> to vector<2x16xf32>
    %290 = arith.mulf %287, %272 : vector<2x16xf32>
    %291 = arith.mulf %286, %288 : vector<2x16xf32>
    %292 = arith.addf %290, %291 : vector<2x16xf32>
    %293 = math.tanh %292 : vector<2x16xf32>
    %294 = arith.mulf %289, %293 : vector<2x16xf32>
    %295 = vector.extract_strided_slice %179 {offsets = [12, 0], sizes = [2, 64], strides = [1, 1]} : vector<16x64xf32> to vector<2x64xf32>
    %cst_68 = arith.constant dense<0.000000e+00> : vector<2x64xf32>
    %296 = tpu.matmul %294, %6, %cst_68 {dimension_numbers = #tpu.dot_dimension_numbers<[1], [0], [0], [1], [0, 0, 1, 1], [], []>} : vector<2x16xf32>, vector<16x64xf32>, vector<2x64xf32> -> vector<2x64xf32>
    %297 = arith.addf %295, %296 : vector<2x64xf32>
    %cst_69 = arith.constant 5.000000e-01 : f32
    %298 = vector.broadcast %cst_69 : f32 to vector<2x64xf32>
    %299 = arith.mulf %298, %297 : vector<2x64xf32>
    %300 = math.tanh %299 : vector<2x64xf32>
    %cst_70 = arith.constant 1.000000e+00 : f32
    %301 = vector.broadcast %cst_70 : f32 to vector<2x64xf32>
    %302 = arith.addf %300, %301 : vector<2x64xf32>
    %cst_71 = arith.constant 5.000000e-01 : f32
    %303 = vector.broadcast %cst_71 : f32 to vector<2x64xf32>
    %304 = arith.mulf %303, %302 : vector<2x64xf32>
    %305 = math.tanh %297 : vector<2x64xf32>
    %306 = vector.extract_strided_slice %304 {offsets = [0, 0], sizes = [2, 16], strides = [1, 1]} : vector<2x64xf32> to vector<2x16xf32>
    %307 = vector.extract_strided_slice %304 {offsets = [0, 16], sizes = [2, 16], strides = [1, 1]} : vector<2x64xf32> to vector<2x16xf32>
    %308 = vector.extract_strided_slice %305 {offsets = [0, 32], sizes = [2, 16], strides = [1, 1]} : vector<2x64xf32> to vector<2x16xf32>
    %309 = vector.extract_strided_slice %304 {offsets = [0, 48], sizes = [2, 16], strides = [1, 1]} : vector<2x64xf32> to vector<2x16xf32>
    %310 = arith.mulf %307, %292 : vector<2x16xf32>
    %311 = arith.mulf %306, %308 : vector<2x16xf32>
    %312 = arith.addf %310, %311 : vector<2x16xf32>
    %313 = math.tanh %312 : vector<2x16xf32>
    %314 = arith.mulf %309, %313 : vector<2x16xf32>
    %315 = vector.extract_strided_slice %179 {offsets = [14, 0], sizes = [2, 64], strides = [1, 1]} : vector<16x64xf32> to vector<2x64xf32>
    %cst_72 = arith.constant dense<0.000000e+00> : vector<2x64xf32>
    %316 = tpu.matmul %314, %6, %cst_72 {dimension_numbers = #tpu.dot_dimension_numbers<[1], [0], [0], [1], [0, 0, 1, 1], [], []>} : vector<2x16xf32>, vector<16x64xf32>, vector<2x64xf32> -> vector<2x64xf32>
    %317 = arith.addf %315, %316 : vector<2x64xf32>
    %cst_73 = arith.constant 5.000000e-01 : f32
    %318 = vector.broadcast %cst_73 : f32 to vector<2x64xf32>
    %319 = arith.mulf %318, %317 : vector<2x64xf32>
    %320 = math.tanh %319 : vector<2x64xf32>
    %cst_74 = arith.constant 1.000000e+00 : f32
    %321 = vector.broadcast %cst_74 : f32 to vector<2x64xf32>
    %322 = arith.addf %320, %321 : vector<2x64xf32>
    %cst_75 = arith.constant 5.000000e-01 : f32
    %323 = vector.broadcast %cst_75 : f32 to vector<2x64xf32>
    %324 = arith.mulf %323, %322 : vector<2x64xf32>
    %325 = math.tanh %317 : vector<2x64xf32>
    %326 = vector.extract_strided_slice %324 {offsets = [0, 0], sizes = [2, 16], strides = [1, 1]} : vector<2x64xf32> to vector<2x16xf32>
    %327 = vector.extract_strided_slice %324 {offsets = [0, 16], sizes = [2, 16], strides = [1, 1]} : vector<2x64xf32> to vector<2x16xf32>
    %328 = vector.extract_strided_slice %325 {offsets = [0, 32], sizes = [2, 16], strides = [1, 1]} : vector<2x64xf32> to vector<2x16xf32>
    %329 = vector.extract_strided_slice %324 {offsets = [0, 48], sizes = [2, 16], strides = [1, 1]} : vector<2x64xf32> to vector<2x16xf32>
    %330 = arith.mulf %327, %312 : vector<2x16xf32>
    %331 = arith.mulf %326, %328 : vector<2x16xf32>
    %332 = arith.addf %330, %331 : vector<2x16xf32>
    %333 = math.tanh %332 : vector<2x16xf32>
    %334 = arith.mulf %329, %333 : vector<2x16xf32>
    %335 = tpu.concatenate %194, %214, %234, %254, %274, %294, %314, %334 in 0 : vector<2x16xf32>, vector<2x16xf32>, vector<2x16xf32>, vector<2x16xf32>, vector<2x16xf32>, vector<2x16xf32>, vector<2x16xf32>, vector<2x16xf32> -> vector<16x16xf32>
    %336 = math.tanh %335 : vector<16x16xf32>
    %c0_76 = arith.constant 0 : index
    %c0_77 = arith.constant 0 : index
    %337 = vector.load %arg2[%c0_76, %c0_77] : memref<16x16xf32, #tpu.memory_space<vmem>>, vector<16x16xf32>
    tpu.vector_store %arg2[%c0_76, %c0_77], %336 {strides = array<i32>} : memref<16x16xf32, #tpu.memory_space<vmem>>, vector<16x16xf32>,
    return
  }
}

</mosaic_0001>

<llo_original>
// kernel: tpu_custom_call.1
$region0: #{tpu_custom_call.1}
  #allocation0 [shape = 'u32[]', space=smem, size = 0x4, offset = 0x4, fixed_abs, tag = 'smem constant byte address 0x4 - core index']
  #allocation1 [shape = 'u32[72,128]{1,0:T(1,128)}', space=vmem, size = 0x9000, scoped, tag = 'internal scratch']
  %s0 = inlined_call_operand.hbm [shape: f32[16,10], index: 0, kind: input, shape index: {}]
  %s1 = inlined_call_operand.hbm [shape: f32[152,128], index: 1, kind: input, shape index: {}]
  %s2 = inlined_call_operand.hbm [shape: f32[16,16], index: 2, kind: output, shape index: {}]
  %s3 = sld [smem:[#allocation0]]
  $region26: #{tpu_custom_call.1} parent=0
    _
  %s5 = ssub.s32 1, %s3
  %s6 = scalar_select 0, %s5, %s3
  $region1: #{tpu_custom_call.1} parent=0
    #allocation2 [shape = 'u8[8192]{0}', space=vmem, size = 0x2000, scoped, tag = 'input window, operand 0, single buffered']
    #allocation3 [shape = 's32[1]{0}', space=sflag, size = 0x4, scoped, tag = 'scoped memory for tpu_custom_call.1']
    #allocation4 [shape = 's32[1]{0}', space=sflag, size = 0x4, scoped, tag = 'scoped memory for tpu_custom_call.1']
    #allocation5 [shape = 'u8[77824]{0}', space=vmem, size = 0x13000, scoped, tag = 'input window, operand 1, single buffered']
    #allocation6 [shape = 's32[1]{0}', space=sflag, size = 0x4, scoped, tag = 'scoped memory for tpu_custom_call.1']
    #allocation7 [shape = 'u8[8192]{0}', space=vmem, size = 0x2000, scoped, tag = 'output window, operand 0, single buffered']
    %7 = vsyncpa [#allocation3], 0
    %8 = vsyncpa [#allocation6], 0
    %9 = vsyncpa [#allocation4], 0
    // Predicated region
    $region2: #{tpu_custom_call.1} parent=1 // pred_check
      _
    $region3: #{tpu_custom_call.1} parent=1 // pred_check_branch
      %11 = sbr.rel (0) target = $region5
    $region4: #{tpu_custom_call.1} parent=1 // pred_region
      %13 = vsyncadd [#allocation3], 0
      %s14 = sshll.u32 %s0, 4
      %s15 = int_to_ptr.hbm [resolvable:$true] %s14
      %s16 = sshll.u32 [#allocation2], 4
      %s17 = int_to_ptr.vmem [resolvable:$true] %s16
      %22 = dma.hbm_to_vmem [thread:$0]  %s15, 256, %s17, [#allocation3], 128, 128, 8
    $region5: #{tpu_custom_call.1} parent=1 // pred_fallthru
      _
    // Predicated region
    $region6: #{tpu_custom_call.1} parent=1 // pred_check
      _
    $region7: #{tpu_custom_call.1} parent=1 // pred_check_branch
      %24 = sbr.rel (0) target = $region9
    $region8: #{tpu_custom_call.1} parent=1 // pred_region
      %26 = vsyncadd [#allocation6], 0
      %s27 = sshll.u32 %s1, 4
      %s28 = int_to_ptr.hbm [resolvable:$true] %s27
      %s29 = sshll.u32 [#allocation5], 4
      %s30 = int_to_ptr.vmem [resolvable:$true] %s29
      %35 = dma.hbm_to_vmem [thread:$0]  %s28, 2432, %s30, [#allocation6], 128, 128, 8
    $region9: #{tpu_custom_call.1} parent=1 // pred_fallthru
      _
    // Predicated region
    $region10: #{tpu_custom_call.1} parent=1 // pred_check
      _
    $region11: #{tpu_custom_call.1} parent=1 // pred_check_branch
      %37 = sbr.rel (0) target = $region13
    $region12: #{tpu_custom_call.1} parent=1 // pred_region
      %39 = dma.done [#allocation3], 256
    $region13: #{tpu_custom_call.1} parent=1 // pred_fallthru
      _
    // Predicated region
    $region14: #{tpu_custom_call.1} parent=1 // pred_check
      _
    $region15: #{tpu_custom_call.1} parent=1 // pred_check_branch
      %41 = sbr.rel (0) target = $region17
    $region16: #{tpu_custom_call.1} parent=1 // pred_region
      %43 = dma.done [#allocation6], 2432
    $region17: #{tpu_custom_call.1} parent=1 // pred_fallthru
      _
    %v44 = vld [vmem:[#allocation5] sm:$0xff]
    %v45 = vld [vmem:[#allocation5 + $0x8] sm:$0x3]
    %v46 = vld [vmem:[#allocation5 + $0x10] sm:$0x1]
    %v47 = vld [vmem:[#allocation5 + $0x18] sm:$0xff]
    %v48 = vld [vmem:[#allocation5 + $0x20] sm:$0xff]
    %v49 = vld [vmem:[#allocation5 + $0x28] sm:$0xff]
    %v50 = vld [vmem:[#allocation5 + $0x30] sm:$0xff]
    %v51 = vld [vmem:[#allocation5 + $0x38] sm:$0xff]
    %v52 = vld [vmem:[#allocation5 + $0x40] sm:$0xff]
    %v53 = vld [vmem:[#allocation5 + $0x48] sm:$0xff]
    %v54 = vld [vmem:[#allocation5 + $0x50] sm:$0xff]
    %v55 = vld [vmem:[#allocation5 + $0x58] sm:$0x1]
    %v56 = vld [vmem:[#allocation5 + $0x60] sm:$0xff]
    %v57 = vld [vmem:[#allocation5 + $0x68] sm:$0xff]
    %v58 = vld [vmem:[#allocation5 + $0x70] sm:$0xff]
    %v59 = vld [vmem:[#allocation5 + $0x78] sm:$0xff]
    %v60 = vld [vmem:[#allocation5 + $0x80] sm:$0xff]
    %v61 = vld [vmem:[#allocation5 + $0x88] sm:$0xff]
    %v62 = vld [vmem:[#allocation5 + $0x90] sm:$0x1]
    %v63 = vld [vmem:[#allocation2] sm:$0xff]
    %v64 = vld [vmem:[#allocation2 + $0x8] sm:$0xff]
    %v65 = vperm.slane %v46, 0
    %vm66 = vcmask 80896
    %v68 = vsel %vm66, %v63, 0
    %v71 = vsel %vm66, %v64, 0
    %vm73 = vcmask 1041408
    %v75 = vsel %vm73, %v45, 0
    %77 = vmatpush.msra.mxu0 0.0
    %78 = vmatpush.msra.mxu0 0.0
    %79 = vmatpush.msra.mxu0 0.0
    %80 = vmatpush.msra.mxu0 0.0
    %81 = vmatpush.msra.mxu0 0.0
    %82 = vmatpush.msra.mxu0 0.0
    %83 = vmatpush.msra.mxu0 0.0
    %84 = vmatpush.msra.mxu0 0.0
    %85 = vmatpush.msra.mxu0 0.0
    %86 = vmatpush.msra.mxu0 0.0
    %87 = vmatpush.msra.mxu0 0.0
    %88 = vmatpush.msra.mxu0 0.0
    %89 = vmatpush.msra.mxu0 0.0
    %90 = vmatpush.msra.mxu0 0.0
    %91 = vmatpush.msra.mxu0 %v75
    %92 = vmatpush.msra.mxu0 %v44
    %93 = vmatmul.f32.gmra.mxu0 %v68
    %v94 = vpop.f32.mrf.mxu0
    %v95 = vadd.f32 %v65, %v94
    %96 = vmatmul.f32.gmra.mxu0 %v71
    %v97 = vpop.f32.mrf.mxu0
    %v98 = vadd.f32 %v65, %v97
    %99 = vdwg.mxu0
    %vm100 = vcmp.gt.f32.partialorder %v95, 0.0
    %vm101 = vcmp.gt.f32.partialorder %v98, 0.0
    %v102 = vmul.f32 %v95, 0.01
    %v103 = vmul.f32 %v98, 0.01
    %v104 = vsel %vm100, %v95, %v102
    %v105 = vsel %vm101, %v98, %v103
    %v106 = vperm.slane %v55, 0
    %vm107 = vcmask 261120
    %v109 = vsel %vm107, %v104, 0
    %v112 = vsel %vm107, %v105, 0
    %114 = vmatpush.msra.mxu0 0.0
    %115 = vmatpush.msra.mxu0 0.0
    %116 = vmatpush.msra.mxu0 0.0
    %117 = vmatpush.msra.mxu0 0.0
    %118 = vmatpush.msra.mxu0 0.0
    %119 = vmatpush.msra.mxu0 0.0
    %120 = vmatpush.msra.mxu0 0.0
    %121 = vmatpush.msra.mxu0 0.0
    %122 = vmatpush.msra.mxu0 0.0
    %123 = vmatpush.msra.mxu0 0.0
    %124 = vmatpush.msra.mxu0 0.0
    %125 = vmatpush.msra.mxu0 0.0
    %126 = vmatpush.msra.mxu0 %v50
    %127 = vmatpush.msra.mxu0 %v49
    %128 = vmatpush.msra.mxu0 %v48
    %129 = vmatpush.msra.mxu0 %v47
    %130 = vmatmul.f32.gmra.mxu0 %v109
    %v131 = vpop.f32.mrf.mxu0
    %v132 = vadd.f32 %v106, %v131
    %133 = vmatmul.f32.gmra.mxu0 %v112
    %v134 = vpop.f32.mrf.mxu0
    %v135 = vadd.f32 %v106, %v134
    %136 = vdwg.mxu0
    %v137 = vmul.f32 %v132, 0.5
    %v138 = vtanh.pop %v137
    %v139 = vadd.f32 %v138, 1.0
    %v140 = vmul.f32 %v139, 0.5
    %v141 = vtanh.pop %v132
    %143 = vrot.lane.b32.xlu0 %v141, 64
    %v144 = vpop.permute.xlu0 %143
    %v146 = vmul.f32 %v140, %v144
    %v147 = vtanh.pop %v146
    %149 = vrot.lane.b32.xlu0 %v147, 96
    %v150 = vpop.permute.xlu0 %149
    %v152 = vmul.f32 %v140, %v150
    %154 = vrot.lane.b32.xlu0 %v152, 32
    %v155 = vpop.permute.xlu0 %154
    %v156 = vsel %vm107, %v155, 0
    %158 = vmatpush.msra.mxu0 0.0
    %159 = vmatpush.msra.mxu0 0.0
    %160 = vmatpush.msra.mxu0 0.0
    %161 = vmatpush.msra.mxu0 0.0
    %162 = vmatpush.msra.mxu0 0.0
    %163 = vmatpush.msra.mxu0 0.0
    %164 = vmatpush.msra.mxu0 0.0
    %165 = vmatpush.msra.mxu0 0.0
    %166 = vmatpush.msra.mxu0 0.0
    %167 = vmatpush.msra.mxu0 0.0
    %168 = vmatpush.msra.mxu0 0.0
    %169 = vmatpush.msra.mxu0 0.0
    %170 = vmatpush.msra.mxu0 %v54
    %171 = vmatpush.msra.mxu0 %v53
    %172 = vmatpush.msra.mxu0 %v52
    %173 = vmatpush.msra.mxu0 %v51
    %174 = vmatmul.f32.gmra.mxu0 %v156
    %v175 = vpop.f32.mrf.mxu0
    %v176 = vadd.f32 0.0, %v175
    %177 = vdwg.mxu0
    %v179 = vrot.slane %v176, 6
    %v181 = vadd.f32 %v132, %v179
    %v182 = vmul.f32 %v181, 0.5
    %v183 = vtanh.pop %v182
    %v184 = vadd.f32 %v183, 1.0
    %v185 = vmul.f32 %v184, 0.5
    %v186 = vtanh.pop %v181
    %v188 = vrot.slane %v146, 6
    %189 = vrot.lane.b32.xlu0 %v188, 32
    %v190 = vpop.permute.xlu0 %189
    %v192 = vmul.f32 %v185, %v190
    %194 = vrot.lane.b32.xlu0 %v186, 64
    %v195 = vpop.permute.xlu0 %194
    %v197 = vmul.f32 %v185, %v195
    %199 = vrot.lane.b32.xlu0 %v197, 32
    %v200 = vpop.permute.xlu0 %199
    %v202 = vadd.f32 %v192, %v200
    %v203 = vtanh.pop %v202
    %205 = vrot.lane.b32.xlu0 %v203, 64
    %v206 = vpop.permute.xlu0 %205
    %v208 = vmul.f32 %v185, %v206
    %v210 = vrot.slane %v208, 2
    %211 = vrot.lane.b32.xlu0 %v210, 32
    %v212 = vpop.permute.xlu0 %211
    %v213 = vsel %vm107, %v212, 0
    %215 = vmatpush.msra.mxu0 0.0
    %216 = vmatpush.msra.mxu0 0.0
    %217 = vmatpush.msra.mxu0 0.0
    %218 = vmatpush.msra.mxu0 0.0
    %219 = vmatpush.msra.mxu0 0.0
    %220 = vmatpush.msra.mxu0 0.0
    %221 = vmatpush.msra.mxu0 0.0
    %222 = vmatpush.msra.mxu0 0.0
    %223 = vmatpush.msra.mxu0 0.0
    %224 = vmatpush.msra.mxu0 0.0
    %225 = vmatpush.msra.mxu0 0.0
    %226 = vmatpush.msra.mxu0 0.0
    %227 = vmatpush.msra.mxu0 %v54
    %228 = vmatpush.msra.mxu0 %v53
    %229 = vmatpush.msra.mxu0 %v52
    %230 = vmatpush.msra.mxu0 %v51
    %231 = vmatmul.f32.gmra.mxu0 %v213
    %v232 = vpop.f32.mrf.mxu0
    %v233 = vadd.f32 0.0, %v232
    %234 = vdwg.mxu0
    %v236 = vrot.slane %v233, 4
    %v238 = vadd.f32 %v132, %v236
    %v239 = vmul.f32 %v238, 0.5
    %v240 = vtanh.pop %v239
    %v241 = vadd.f32 %v240, 1.0
    %v242 = vmul.f32 %v241, 0.5
    %v243 = vtanh.pop %v238
    %v245 = vrot.slane %v202, 6
    %v247 = vmul.f32 %v242, %v245
    %249 = vrot.lane.b32.xlu0 %v243, 64
    %v250 = vpop.permute.xlu0 %249
    %v252 = vmul.f32 %v242, %v250
    %254 = vrot.lane.b32.xlu0 %v252, 32
    %v255 = vpop.permute.xlu0 %254
    %v257 = vadd.f32 %v247, %v255
    %v258 = vtanh.pop %v257
    %260 = vrot.lane.b32.xlu0 %v258, 64
    %v261 = vpop.permute.xlu0 %260
    %v263 = vmul.f32 %v242, %v261
    %v265 = vrot.slane %v263, 4
    %266 = vrot.lane.b32.xlu0 %v265, 32
    %v267 = vpop.permute.xlu0 %266
    %v268 = vsel %vm107, %v267, 0
    %270 = vmatpush.msra.mxu0 0.0
    %271 = vmatpush.msra.mxu0 0.0
    %272 = vmatpush.msra.mxu0 0.0
    %273 = vmatpush.msra.mxu0 0.0
    %274 = vmatpush.msra.mxu0 0.0
    %275 = vmatpush.msra.mxu0 0.0
    %276 = vmatpush.msra.mxu0 0.0
    %277 = vmatpush.msra.mxu0 0.0
    %278 = vmatpush.msra.mxu0 0.0
    %279 = vmatpush.msra.mxu0 0.0
    %280 = vmatpush.msra.mxu0 0.0
    %281 = vmatpush.msra.mxu0 0.0
    %282 = vmatpush.msra.mxu0 %v54
    %283 = vmatpush.msra.mxu0 %v53
    %284 = vmatpush.msra.mxu0 %v52
    %285 = vmatpush.msra.mxu0 %v51
    %286 = vmatmul.f32.gmra.mxu0 %v268
    %v287 = vpop.f32.mrf.mxu0
    %v288 = vadd.f32 0.0, %v287
    %289 = vdwg.mxu0
    %v291 = vrot.slane %v288, 2
    %v293 = vadd.f32 %v132, %v291
    %v294 = vmul.f32 %v293, 0.5
    %v295 = vtanh.pop %v294
    %v296 = vadd.f32 %v295, 1.0
    %v297 = vmul.f32 %v296, 0.5
    %v298 = vtanh.pop %v293
    %v300 = vrot.slane %v257, 6
    %v302 = vmul.f32 %v297, %v300
    %304 = vrot.lane.b32.xlu0 %v298, 64
    %v305 = vpop.permute.xlu0 %304
    %v307 = vmul.f32 %v297, %v305
    %309 = vrot.lane.b32.xlu0 %v307, 32
    %v310 = vpop.permute.xlu0 %309
    %v312 = vadd.f32 %v302, %v310
    %v313 = vtanh.pop %v312
    %315 = vrot.lane.b32.xlu0 %v313, 64
    %v316 = vpop.permute.xlu0 %315
    %v318 = vmul.f32 %v297, %v316
    %v320 = vrot.slane %v318, 6
    %321 = vrot.lane.b32.xlu0 %v320, 32
    %v322 = vpop.permute.xlu0 %321
    %v323 = vsel %vm107, %v322, 0
    %325 = vmatpush.msra.mxu0 0.0
    %326 = vmatpush.msra.mxu0 0.0
    %327 = vmatpush.msra.mxu0 0.0
    %328 = vmatpush.msra.mxu0 0.0
    %329 = vmatpush.msra.mxu0 0.0
    %330 = vmatpush.msra.mxu0 0.0
    %331 = vmatpush.msra.mxu0 0.0
    %332 = vmatpush.msra.mxu0 0.0
    %333 = vmatpush.msra.mxu0 0.0
    %334 = vmatpush.msra.mxu0 0.0
    %335 = vmatpush.msra.mxu0 0.0
    %336 = vmatpush.msra.mxu0 0.0
    %337 = vmatpush.msra.mxu0 %v54
    %338 = vmatpush.msra.mxu0 %v53
    %339 = vmatpush.msra.mxu0 %v52
    %340 = vmatpush.msra.mxu0 %v51
    %341 = vmatmul.f32.gmra.mxu0 %v323
    %v342 = vpop.f32.mrf.mxu0
    %v343 = vadd.f32 0.0, %v342
    %344 = vdwg.mxu0
    %v345 = vadd.f32 %v135, %v343
    %v346 = vmul.f32 %v345, 0.5
    %v347 = vtanh.pop %v346
    %v348 = vadd.f32 %v347, 1.0
    %v349 = vmul.f32 %v348, 0.5
    %v350 = vtanh.pop %v345
    %v352 = vrot.slane %v312, 6
    %v354 = vmul.f32 %v349, %v352
    %356 = vrot.lane.b32.xlu0 %v350, 64
    %v357 = vpop.permute.xlu0 %356
    %v359 = vmul.f32 %v349, %v357
    %361 = vrot.lane.b32.xlu0 %v359, 32
    %v362 = vpop.permute.xlu0 %361
    %v364 = vadd.f32 %v354, %v362
    %v365 = vtanh.pop %v364
    %367 = vrot.lane.b32.xlu0 %v365, 64
    %v368 = vpop.permute.xlu0 %367
    %v370 = vmul.f32 %v349, %v368
    %372 = vrot.lane.b32.xlu0 %v370, 32
    %v373 = vpop.permute.xlu0 %372
    %v374 = vsel %vm107, %v373, 0
    %376 = vmatpush.msra.mxu0 0.0
    %377 = vmatpush.msra.mxu0 0.0
    %378 = vmatpush.msra.mxu0 0.0
    %379 = vmatpush.msra.mxu0 0.0
    %380 = vmatpush.msra.mxu0 0.0
    %381 = vmatpush.msra.mxu0 0.0
    %382 = vmatpush.msra.mxu0 0.0
    %383 = vmatpush.msra.mxu0 0.0
    %384 = vmatpush.msra.mxu0 0.0
    %385 = vmatpush.msra.mxu0 0.0
    %386 = vmatpush.msra.mxu0 0.0
    %387 = vmatpush.msra.mxu0 0.0
    %388 = vmatpush.msra.mxu0 %v54
    %389 = vmatpush.msra.mxu0 %v53
    %390 = vmatpush.msra.mxu0 %v52
    %391 = vmatpush.msra.mxu0 %v51
    %392 = vmatmul.f32.gmra.mxu0 %v374
    %v393 = vpop.f32.mrf.mxu0
    %v394 = vadd.f32 0.0, %v393
    %395 = vdwg.mxu0
    %v397 = vrot.slane %v394, 6
    %v399 = vadd.f32 %v135, %v397
    %v400 = vmul.f32 %v399, 0.5
    %v401 = vtanh.pop %v400
    %v402 = vadd.f32 %v401, 1.0
    %v403 = vmul.f32 %v402, 0.5
    %v404 = vtanh.pop %v399
    %v406 = vrot.slane %v364, 6
    %v408 = vmul.f32 %v403, %v406
    %410 = vrot.lane.b32.xlu0 %v404, 64
    %v411 = vpop.permute.xlu0 %410
    %v413 = vmul.f32 %v403, %v411
    %415 = vrot.lane.b32.xlu0 %v413, 32
    %v416 = vpop.permute.xlu0 %415
    %v418 = vadd.f32 %v408, %v416
    %v419 = vtanh.pop %v418
    %421 = vrot.lane.b32.xlu0 %v419, 64
    %v422 = vpop.permute.xlu0 %421
    %v424 = vmul.f32 %v403, %v422
    %v426 = vrot.slane %v424, 2
    %427 = vrot.lane.b32.xlu0 %v426, 32
    %v428 = vpop.permute.xlu0 %427
    %v429 = vsel %vm107, %v428, 0
    %431 = vmatpush.msra.mxu0 0.0
    %432 = vmatpush.msra.mxu0 0.0
    %433 = vmatpush.msra.mxu0 0.0
    %434 = vmatpush.msra.mxu0 0.0
    %435 = vmatpush.msra.mxu0 0.0
    %436 = vmatpush.msra.mxu0 0.0
    %437 = vmatpush.msra.mxu0 0.0
    %438 = vmatpush.msra.mxu0 0.0
    %439 = vmatpush.msra.mxu0 0.0
    %440 = vmatpush.msra.mxu0 0.0
    %441 = vmatpush.msra.mxu0 0.0
    %442 = vmatpush.msra.mxu0 0.0
    %443 = vmatpush.msra.mxu0 %v54
    %444 = vmatpush.msra.mxu0 %v53
    %445 = vmatpush.msra.mxu0 %v52
    %446 = vmatpush.msra.mxu0 %v51
    %447 = vmatmul.f32.gmra.mxu0 %v429
    %v448 = vpop.f32.mrf.mxu0
    %v449 = vadd.f32 0.0, %v448
    %450 = vdwg.mxu0
    %v452 = vrot.slane %v449, 4
    %v454 = vadd.f32 %v135, %v452
    %v455 = vmul.f32 %v454, 0.5
    %v456 = vtanh.pop %v455
    %v457 = vadd.f32 %v456, 1.0
    %v458 = vmul.f32 %v457, 0.5
    %v459 = vtanh.pop %v454
    %v461 = vrot.slane %v418, 6
    %v463 = vmul.f32 %v458, %v461
    %465 = vrot.lane.b32.xlu0 %v459, 64
    %v466 = vpop.permute.xlu0 %465
    %v468 = vmul.f32 %v458, %v466
    %470 = vrot.lane.b32.xlu0 %v468, 32
    %v471 = vpop.permute.xlu0 %470
    %v473 = vadd.f32 %v463, %v471
    %v474 = vtanh.pop %v473
    %476 = vrot.lane.b32.xlu0 %v474, 64
    %v477 = vpop.permute.xlu0 %476
    %v479 = vmul.f32 %v458, %v477
    %v481 = vrot.slane %v479, 4
    %482 = vrot.lane.b32.xlu0 %v481, 32
    %v483 = vpop.permute.xlu0 %482
    %v484 = vsel %vm107, %v483, 0
    %486 = vmatpush.msra.mxu0 0.0
    %487 = vmatpush.msra.mxu0 0.0
    %488 = vmatpush.msra.mxu0 0.0
    %489 = vmatpush.msra.mxu0 0.0
    %490 = vmatpush.msra.mxu0 0.0
    %491 = vmatpush.msra.mxu0 0.0
    %492 = vmatpush.msra.mxu0 0.0
    %493 = vmatpush.msra.mxu0 0.0
    %494 = vmatpush.msra.mxu0 0.0
    %495 = vmatpush.msra.mxu0 0.0
    %496 = vmatpush.msra.mxu0 0.0
    %497 = vmatpush.msra.mxu0 0.0
    %498 = vmatpush.msra.mxu0 %v54
    %499 = vmatpush.msra.mxu0 %v53
    %500 = vmatpush.msra.mxu0 %v52
    %501 = vmatpush.msra.mxu0 %v51
    %502 = vmatmul.f32.gmra.mxu0 %v484
    %v503 = vpop.f32.mrf.mxu0
    %v504 = vadd.f32 0.0, %v503
    %505 = vdwg.mxu0
    %v507 = vrot.slane %v504, 2
    %v509 = vadd.f32 %v135, %v507
    %v510 = vmul.f32 %v509, 0.5
    %v511 = vtanh.pop %v510
    %v512 = vadd.f32 %v511, 1.0
    %v513 = vmul.f32 %v512, 0.5
    %v514 = vtanh.pop %v509
    %v516 = vrot.slane %v473, 6
    %v518 = vmul.f32 %v513, %v516
    %520 = vrot.lane.b32.xlu0 %v514, 64
    %v521 = vpop.permute.xlu0 %520
    %v523 = vmul.f32 %v513, %v521
    %525 = vrot.lane.b32.xlu0 %v523, 32
    %v526 = vpop.permute.xlu0 %525
    %v528 = vadd.f32 %v518, %v526
    %v529 = vtanh.pop %v528
    %531 = vrot.lane.b32.xlu0 %v529, 64
    %v532 = vpop.permute.xlu0 %531
    %v534 = vmul.f32 %v513, %v532
    %v535 = vsel %vm73, %v152, %v208
    %vm536 = vcmask 1043456
    %v537 = vsel %vm536, %v535, %v263
    %vm538 = vcmask 1045504
    %v539 = vsel %vm538, %v537, %v318
    %v540 = vsel %vm73, %v370, %v424
    %v541 = vsel %vm536, %v540, %v479
    %v542 = vsel %vm538, %v541, %v534
    %v543 = vtanh.pop %v539
    %v544 = vtanh.pop %v542
    %v545 = vperm.slane %v62, 0
    %548 = vrot.lane.b32.xlu0 %v543, 32
    %v549 = vpop.permute.xlu0 %548
    %550 = vrot.lane.b32.xlu0 %v544, 32
    %v551 = vpop.permute.xlu0 %550
    %v552 = vsel %vm107, %v549, 0
    %v554 = vsel %vm107, %v551, 0
    %556 = vmatpush.msra.mxu0 0.0
    %557 = vmatpush.msra.mxu0 0.0
    %558 = vmatpush.msra.mxu0 0.0
    %559 = vmatpush.msra.mxu0 0.0
    %560 = vmatpush.msra.mxu0 0.0
    %561 = vmatpush.msra.mxu0 0.0
    %562 = vmatpush.msra.mxu0 0.0
    %563 = vmatpush.msra.mxu0 0.0
    %564 = vmatpush.msra.mxu0 0.0
    %565 = vmatpush.msra.mxu0 0.0
    %566 = vmatpush.msra.mxu0 0.0
    %567 = vmatpush.msra.mxu0 0.0
    %568 = vmatpush.msra.mxu0 %v59
    %569 = vmatpush.msra.mxu0 %v58
    %570 = vmatpush.msra.mxu0 %v57
    %571 = vmatpush.msra.mxu0 %v56
    %572 = vmatmul.f32.gmra.mxu0 %v552
    %v573 = vpop.f32.mrf.mxu0
    %v574 = vadd.f32 %v545, %v573
    %575 = vmatmul.f32.gmra.mxu0 %v554
    %v576 = vpop.f32.mrf.mxu0
    %v577 = vadd.f32 %v545, %v576
    %578 = vdwg.mxu0
    %v579 = vmul.f32 %v574, 0.5
    %v580 = vtanh.pop %v579
    %v581 = vadd.f32 %v580, 1.0
    %v582 = vmul.f32 %v581, 0.5
    %v583 = vtanh.pop %v574
    %585 = vrot.lane.b32.xlu0 %v583, 96
    %v586 = vpop.permute.xlu0 %585
    %v588 = vmul.f32 %v582, %v586
    %v589 = vtanh.pop %v588
    %591 = vrot.lane.b32.xlu0 %v589, 48
    %v592 = vpop.permute.xlu0 %591
    %v594 = vmul.f32 %v582, %v592
    %596 = vrot.lane.b32.xlu0 %v594, 80
    %v597 = vpop.permute.xlu0 %596
    %vm598 = vcmask 130048
    %v599 = vsel %vm598, %v597, 0
    %601 = vmatpush.msra.mxu0 0.0
    %602 = vmatpush.msra.mxu0 0.0
    %603 = vmatpush.msra.mxu0 0.0
    %604 = vmatpush.msra.mxu0 0.0
    %605 = vmatpush.msra.mxu0 0.0
    %606 = vmatpush.msra.mxu0 0.0
    %607 = vmatpush.msra.mxu0 0.0
    %608 = vmatpush.msra.mxu0 0.0
    %609 = vmatpush.msra.mxu0 0.0
    %610 = vmatpush.msra.mxu0 0.0
    %611 = vmatpush.msra.mxu0 0.0
    %612 = vmatpush.msra.mxu0 0.0
    %613 = vmatpush.msra.mxu0 0.0
    %614 = vmatpush.msra.mxu0 0.0
    %615 = vmatpush.msra.mxu0 %v61
    %616 = vmatpush.msra.mxu0 %v60
    %617 = vmatmul.f32.gmra.mxu0 %v599
    %v618 = vpop.f32.mrf.mxu0
    %v619 = vadd.f32 0.0, %v618
    %620 = vdwg.mxu0
    %v622 = vrot.slane %v619, 6
    %v624 = vadd.f32 %v574, %v622
    %v625 = vmul.f32 %v624, 0.5
    %v626 = vtanh.pop %v625
    %v627 = vadd.f32 %v626, 1.0
    %v628 = vmul.f32 %v627, 0.5
    %v629 = vtanh.pop %v624
    %v631 = vrot.slane %v588, 6
    %632 = vrot.lane.b32.xlu0 %v631, 16
    %v633 = vpop.permute.xlu0 %632
    %v635 = vmul.f32 %v628, %v633
    %637 = vrot.lane.b32.xlu0 %v629, 96
    %v638 = vpop.permute.xlu0 %637
    %v640 = vmul.f32 %v628, %v638
    %642 = vrot.lane.b32.xlu0 %v640, 16
    %v643 = vpop.permute.xlu0 %642
    %v645 = vadd.f32 %v635, %v643
    %v646 = vtanh.pop %v645
    %648 = vrot.lane.b32.xlu0 %v646, 32
    %v649 = vpop.permute.xlu0 %648
    %v651 = vmul.f32 %v628, %v649
    %v653 = vrot.slane %v651, 2
    %654 = vrot.lane.b32.xlu0 %v653, 80
    %v655 = vpop.permute.xlu0 %654
    %v656 = vsel %vm598, %v655, 0
    %658 = vmatpush.msra.mxu0 0.0
    %659 = vmatpush.msra.mxu0 0.0
    %660 = vmatpush.msra.mxu0 0.0
    %661 = vmatpush.msra.mxu0 0.0
    %662 = vmatpush.msra.mxu0 0.0
    %663 = vmatpush.msra.mxu0 0.0
    %664 = vmatpush.msra.mxu0 0.0
    %665 = vmatpush.msra.mxu0 0.0
    %666 = vmatpush.msra.mxu0 0.0
    %667 = vmatpush.msra.mxu0 0.0
    %668 = vmatpush.msra.mxu0 0.0
    %669 = vmatpush.msra.mxu0 0.0
    %670 = vmatpush.msra.mxu0 0.0
    %671 = vmatpush.msra.mxu0 0.0
    %672 = vmatpush.msra.mxu0 %v61
    %673 = vmatpush.msra.mxu0 %v60
    %674 = vmatmul.f32.gmra.mxu0 %v656
    %v675 = vpop.f32.mrf.mxu0
    %v676 = vadd.f32 0.0, %v675
    %677 = vdwg.mxu0
    %v679 = vrot.slane %v676, 4
    %v681 = vadd.f32 %v574, %v679
    %v682 = vmul.f32 %v681, 0.5
    %v683 = vtanh.pop %v682
    %v684 = vadd.f32 %v683, 1.0
    %v685 = vmul.f32 %v684, 0.5
    %v686 = vtanh.pop %v681
    %v688 = vrot.slane %v645, 6
    %v690 = vmul.f32 %v685, %v688
    %692 = vrot.lane.b32.xlu0 %v686, 96
    %v693 = vpop.permute.xlu0 %692
    %v695 = vmul.f32 %v685, %v693
    %697 = vrot.lane.b32.xlu0 %v695, 16
    %v698 = vpop.permute.xlu0 %697
    %v700 = vadd.f32 %v690, %v698
    %v701 = vtanh.pop %v700
    %703 = vrot.lane.b32.xlu0 %v701, 32
    %v704 = vpop.permute.xlu0 %703
    %v706 = vmul.f32 %v685, %v704
    %v708 = vrot.slane %v706, 4
    %709 = vrot.lane.b32.xlu0 %v708, 80
    %v710 = vpop.permute.xlu0 %709
    %v711 = vsel %vm598, %v710, 0
    %713 = vmatpush.msra.mxu0 0.0
    %714 = vmatpush.msra.mxu0 0.0
    %715 = vmatpush.msra.mxu0 0.0
    %716 = vmatpush.msra.mxu0 0.0
    %717 = vmatpush.msra.mxu0 0.0
    %718 = vmatpush.msra.mxu0 0.0
    %719 = vmatpush.msra.mxu0 0.0
    %720 = vmatpush.msra.mxu0 0.0
    %721 = vmatpush.msra.mxu0 0.0
    %722 = vmatpush.msra.mxu0 0.0
    %723 = vmatpush.msra.mxu0 0.0
    %724 = vmatpush.msra.mxu0 0.0
    %725 = vmatpush.msra.mxu0 0.0
    %726 = vmatpush.msra.mxu0 0.0
    %727 = vmatpush.msra.mxu0 %v61
    %728 = vmatpush.msra.mxu0 %v60
    %729 = vmatmul.f32.gmra.mxu0 %v711
    %v730 = vpop.f32.mrf.mxu0
    %v731 = vadd.f32 0.0, %v730
    %732 = vdwg.mxu0
    %v734 = vrot.slane %v731, 2
    %v736 = vadd.f32 %v574, %v734
    %v737 = vmul.f32 %v736, 0.5
    %v738 = vtanh.pop %v737
    %v739 = vadd.f32 %v738, 1.0
    %v740 = vmul.f32 %v739, 0.5
    %v741 = vtanh.pop %v736
    %v743 = vrot.slane %v700, 6
    %v745 = vmul.f32 %v740, %v743
    %747 = vrot.lane.b32.xlu0 %v741, 96
    %v748 = vpop.permute.xlu0 %747
    %v750 = vmul.f32 %v740, %v748
    %752 = vrot.lane.b32.xlu0 %v750, 16
    %v753 = vpop.permute.xlu0 %752
    %v755 = vadd.f32 %v745, %v753
    %v756 = vtanh.pop %v755
    %758 = vrot.lane.b32.xlu0 %v756, 32
    %v759 = vpop.permute.xlu0 %758
    %v761 = vmul.f32 %v740, %v759
    %v763 = vrot.slane %v761, 6
    %764 = vrot.lane.b32.xlu0 %v763, 80
    %v765 = vpop.permute.xlu0 %764
    %v766 = vsel %vm598, %v765, 0
    %768 = vmatpush.msra.mxu0 0.0
    %769 = vmatpush.msra.mxu0 0.0
    %770 = vmatpush.msra.mxu0 0.0
    %771 = vmatpush.msra.mxu0 0.0
    %772 = vmatpush.msra.mxu0 0.0
    %773 = vmatpush.msra.mxu0 0.0
    %774 = vmatpush.msra.mxu0 0.0
    %775 = vmatpush.msra.mxu0 0.0
    %776 = vmatpush.msra.mxu0 0.0
    %777 = vmatpush.msra.mxu0 0.0
    %778 = vmatpush.msra.mxu0 0.0
    %779 = vmatpush.msra.mxu0 0.0
    %780 = vmatpush.msra.mxu0 0.0
    %781 = vmatpush.msra.mxu0 0.0
    %782 = vmatpush.msra.mxu0 %v61
    %783 = vmatpush.msra.mxu0 %v60
    %784 = vmatmul.f32.gmra.mxu0 %v766
    %v785 = vpop.f32.mrf.mxu0
    %v786 = vadd.f32 0.0, %v785
    %787 = vdwg.mxu0
    %v788 = vadd.f32 %v577, %v786
    %v789 = vmul.f32 %v788, 0.5
    %v790 = vtanh.pop %v789
    %v791 = vadd.f32 %v790, 1.0
    %v792 = vmul.f32 %v791, 0.5
    %v793 = vtanh.pop %v788
    %v795 = vrot.slane %v755, 6
    %v797 = vmul.f32 %v792, %v795
    %799 = vrot.lane.b32.xlu0 %v793, 96
    %v800 = vpop.permute.xlu0 %799
    %v802 = vmul.f32 %v792, %v800
    %804 = vrot.lane.b32.xlu0 %v802, 16
    %v805 = vpop.permute.xlu0 %804
    %v807 = vadd.f32 %v797, %v805
    %v808 = vtanh.pop %v807
    %810 = vrot.lane.b32.xlu0 %v808, 32
    %v811 = vpop.permute.xlu0 %810
    %v813 = vmul.f32 %v792, %v811
    %815 = vrot.lane.b32.xlu0 %v813, 80
    %v816 = vpop.permute.xlu0 %815
    %v817 = vsel %vm598, %v816, 0
    %819 = vmatpush.msra.mxu0 0.0
    %820 = vmatpush.msra.mxu0 0.0
    %821 = vmatpush.msra.mxu0 0.0
    %822 = vmatpush.msra.mxu0 0.0
    %823 = vmatpush.msra.mxu0 0.0
    %824 = vmatpush.msra.mxu0 0.0
    %825 = vmatpush.msra.mxu0 0.0
    %826 = vmatpush.msra.mxu0 0.0
    %827 = vmatpush.msra.mxu0 0.0
    %828 = vmatpush.msra.mxu0 0.0
    %829 = vmatpush.msra.mxu0 0.0
    %830 = vmatpush.msra.mxu0 0.0
    %831 = vmatpush.msra.mxu0 0.0
    %832 = vmatpush.msra.mxu0 0.0
    %833 = vmatpush.msra.mxu0 %v61
    %834 = vmatpush.msra.mxu0 %v60
    %835 = vmatmul.f32.gmra.mxu0 %v817
    %v836 = vpop.f32.mrf.mxu0
    %v837 = vadd.f32 0.0, %v836
    %838 = vdwg.mxu0
    %v840 = vrot.slane %v837, 6
    %v842 = vadd.f32 %v577, %v840
    %v843 = vmul.f32 %v842, 0.5
    %v844 = vtanh.pop %v843
    %v845 = vadd.f32 %v844, 1.0
    %v846 = vmul.f32 %v845, 0.5
    %v847 = vtanh.pop %v842
    %v849 = vrot.slane %v807, 6
    %v851 = vmul.f32 %v846, %v849
    %853 = vrot.lane.b32.xlu0 %v847, 96
    %v854 = vpop.permute.xlu0 %853
    %v856 = vmul.f32 %v846, %v854
    %858 = vrot.lane.b32.xlu0 %v856, 16
    %v859 = vpop.permute.xlu0 %858
    %v861 = vadd.f32 %v851, %v859
    %v862 = vtanh.pop %v861
    %864 = vrot.lane.b32.xlu0 %v862, 32
    %v865 = vpop.permute.xlu0 %864
    %v867 = vmul.f32 %v846, %v865
    %v869 = vrot.slane %v867, 2
    %870 = vrot.lane.b32.xlu0 %v869, 80
    %v871 = vpop.permute.xlu0 %870
    %v872 = vsel %vm598, %v871, 0
    %874 = vmatpush.msra.mxu0 0.0
    %875 = vmatpush.msra.mxu0 0.0
    %876 = vmatpush.msra.mxu0 0.0
    %877 = vmatpush.msra.mxu0 0.0
    %878 = vmatpush.msra.mxu0 0.0
    %879 = vmatpush.msra.mxu0 0.0
    %880 = vmatpush.msra.mxu0 0.0
    %881 = vmatpush.msra.mxu0 0.0
    %882 = vmatpush.msra.mxu0 0.0
    %883 = vmatpush.msra.mxu0 0.0
    %884 = vmatpush.msra.mxu0 0.0
    %885 = vmatpush.msra.mxu0 0.0
    %886 = vmatpush.msra.mxu0 0.0
    %887 = vmatpush.msra.mxu0 0.0
    %888 = vmatpush.msra.mxu0 %v61
    %889 = vmatpush.msra.mxu0 %v60
    %890 = vmatmul.f32.gmra.mxu0 %v872
    %v891 = vpop.f32.mrf.mxu0
    %v892 = vadd.f32 0.0, %v891
    %893 = vdwg.mxu0
    %v895 = vrot.slane %v892, 4
    %v897 = vadd.f32 %v577, %v895
    %v898 = vmul.f32 %v897, 0.5
    %v899 = vtanh.pop %v898
    %v900 = vadd.f32 %v899, 1.0
    %v901 = vmul.f32 %v900, 0.5
    %v902 = vtanh.pop %v897
    %v904 = vrot.slane %v861, 6
    %v906 = vmul.f32 %v901, %v904
    %908 = vrot.lane.b32.xlu0 %v902, 96
    %v909 = vpop.permute.xlu0 %908
    %v911 = vmul.f32 %v901, %v909
    %913 = vrot.lane.b32.xlu0 %v911, 16
    %v914 = vpop.permute.xlu0 %913
    %v916 = vadd.f32 %v906, %v914
    %v917 = vtanh.pop %v916
    %919 = vrot.lane.b32.xlu0 %v917, 32
    %v920 = vpop.permute.xlu0 %919
    %v922 = vmul.f32 %v901, %v920
    %v924 = vrot.slane %v922, 4
    %925 = vrot.lane.b32.xlu0 %v924, 80
    %v926 = vpop.permute.xlu0 %925
    %v927 = vsel %vm598, %v926, 0
    %929 = vmatpush.msra.mxu0 0.0
    %930 = vmatpush.msra.mxu0 0.0
    %931 = vmatpush.msra.mxu0 0.0
    %932 = vmatpush.msra.mxu0 0.0
    %933 = vmatpush.msra.mxu0 0.0
    %934 = vmatpush.msra.mxu0 0.0
    %935 = vmatpush.msra.mxu0 0.0
    %936 = vmatpush.msra.mxu0 0.0
    %937 = vmatpush.msra.mxu0 0.0
    %938 = vmatpush.msra.mxu0 0.0
    %939 = vmatpush.msra.mxu0 0.0
    %940 = vmatpush.msra.mxu0 0.0
    %941 = vmatpush.msra.mxu0 0.0
    %942 = vmatpush.msra.mxu0 0.0
    %943 = vmatpush.msra.mxu0 %v61
    %944 = vmatpush.msra.mxu0 %v60
    %945 = vmatmul.f32.gmra.mxu0 %v927
    %v946 = vpop.f32.mrf.mxu0
    %v947 = vadd.f32 0.0, %v946
    %948 = vdwg.mxu0
    %v950 = vrot.slane %v947, 2
    %v952 = vadd.f32 %v577, %v950
    %v953 = vmul.f32 %v952, 0.5
    %v954 = vtanh.pop %v953
    %v955 = vadd.f32 %v954, 1.0
    %v956 = vmul.f32 %v955, 0.5
    %v957 = vtanh.pop %v952
    %v959 = vrot.slane %v916, 6
    %v961 = vmul.f32 %v956, %v959
    %963 = vrot.lane.b32.xlu0 %v957, 96
    %v964 = vpop.permute.xlu0 %963
    %v966 = vmul.f32 %v956, %v964
    %968 = vrot.lane.b32.xlu0 %v966, 16
    %v969 = vpop.permute.xlu0 %968
    %v971 = vadd.f32 %v961, %v969
    %v972 = vtanh.pop %v971
    %974 = vrot.lane.b32.xlu0 %v972, 32
    %v975 = vpop.permute.xlu0 %974
    %v977 = vmul.f32 %v956, %v975
    %v978 = vsel %vm73, %v594, %v651
    %v979 = vsel %vm536, %v978, %v706
    %v980 = vsel %vm538, %v979, %v761
    %v981 = vsel %vm73, %v813, %v867
    %v982 = vsel %vm536, %v981, %v922
    %v983 = vsel %vm538, %v982, %v977
    %v984 = vtanh.pop %v980
    %v985 = vtanh.pop %v983
    %988 = vrot.lane.b32.xlu0 %v984, 80
    %v989 = vpop.permute.xlu0 %988
    %990 = vrot.lane.b32.xlu0 %v985, 80
    %v991 = vpop.permute.xlu0 %990
    %994 = vst.msk [vmem:[#allocation7] sm:$0xff] %vm598, %v989
    %995 = vst.msk [vmem:[#allocation7 + $0x8] sm:$0xff] %vm598, %v991
    // Predicated region
    $region18: #{tpu_custom_call.1} parent=1 // pred_check
      _
    $region19: #{tpu_custom_call.1} parent=1 // pred_check_branch
      %997 = sbr.rel (0) target = $region21
    $region20: #{tpu_custom_call.1} parent=1 // pred_region
      %999 = vsyncadd [#allocation4], 0
      %s1000 = sshll.u32 [#allocation7], 4
      %s1001 = int_to_ptr.vmem [resolvable:$true] %s1000
      %s1002 = sshll.u32 %s2, 4
      %s1003 = int_to_ptr.hbm [resolvable:$true] %s1002
      %1008 = dma.vmem_to_hbm [thread:$0]  %s1001, 256, %s1003, [#allocation4], 128, 128, 8
    $region21: #{tpu_custom_call.1} parent=1 // pred_fallthru
      _
    // Predicated region
    $region22: #{tpu_custom_call.1} parent=1 // pred_check
      _
    $region23: #{tpu_custom_call.1} parent=1 // pred_check_branch
      %1010 = sbr.rel (0) target = $region25
    $region24: #{tpu_custom_call.1} parent=1 // pred_region
      %1012 = dma.done [#allocation4], 256
    $region25: #{tpu_custom_call.1} parent=1 // pred_fallthru
      _
    %1013 = vsyncpa [#allocation3], 1
    %1014 = vsyncpa [#allocation6], 1
    %1015 = vsyncpa [#allocation4], 1

</llo_original>
